<compile_context>
chip_gen: v7x
topology: tpu7x:2x2x1
jax: 0.10.0
libtpu: 0.0.40
codegen_flags: <defaults>
</compile_context>

<pallas_src>
import jax
import jax.numpy as jnp
from jax.experimental import pallas as pl
from jax.experimental.pallas import tpu as pltpu


def _round_up(x: int, m: int) -> int:
    return (x + m - 1) // m * m


def _vmem_capacity_bytes() -> int:
    """Per-core VMEM capacity; conservative (v7x-like) fallback if the query fails."""
    try:
        return int(pltpu.get_tpu_info().vmem_capacity_bytes)
    except Exception:
        return 64 << 20


def _plan_tiling(in_features: int, mid: int, out_features: int) -> dict:
    """Generation-aware, batch-independent tile plan for the head."""
    vmem_cap = _vmem_capacity_bytes()
    if vmem_cap >= (96 << 20):              # v5e / v6e: 128 MiB VMEM
        tk_pref, vmem_limit = 2048, 96 << 20
    else:                                   # v7x: 64 MiB VMEM per TensorCore
        tk_pref, vmem_limit = 1024, 48 << 20

    mid_pad = _round_up(mid, 128)
    out_pad = _round_up(out_features, 128)

    def _vmem_use(tk_: int, tm_: int = 512) -> int:
        return (2 * tk_ * mid_pad * 2        # w1 double buffer (bf16)
                + mid_pad * out_pad * 2      # w2 resident (bf16)
                + tm_ * mid_pad * 4          # f32 accumulator scratch
                + 2 * tm_ * tk_ * 2          # x double buffer (bf16)
                + 2 * tm_ * out_pad * 4)     # output double buffer (f32)

    k128 = _round_up(in_features, 128)
    if k128 <= tk_pref and _vmem_use(k128) <= (vmem_limit * 3) // 4:
        tk = k128                            # whole K in one block -> fused fast path
    else:
        tk = tk_pref                         # streamed path; keep tk lane-aligned (512/1024/2048)
        while tk > 512 and _vmem_use(tk) > (vmem_limit * 3) // 4:
            tk //= 2

    return dict(tk=tk, k_pad=_round_up(in_features, tk), mid_pad=mid_pad,
                out_pad=out_pad, vmem_limit=vmem_limit)


def _head_kernel_fused(x_ref, w1_ref, b1_ref, w2_ref, b2_ref, o_ref):
    # Whole K fits in one block: Linear -> LeakyReLU(0.1) -> Linear in a single fused step.
    h = jnp.dot(x_ref[...], w1_ref[...], preferred_element_type=jnp.float32) + b1_ref[...]
    h = jnp.where(h > 0, h, 0.1 * h)
    out = jnp.dot(h.astype(w2_ref.dtype), w2_ref[...],
                  preferred_element_type=jnp.float32) + b2_ref[...]
    o_ref[...] = out.astype(o_ref.dtype)


def _head_kernel_ktiled(x_ref, w1_ref, b1_ref, w2_ref, b2_ref, o_ref, acc_ref):
    k = pl.program_id(1)

    @pl.when(k == 0)
    def _():
        acc_ref[...] = jnp.zeros_like(acc_ref)

    # Streamed K-tile of the first linear: bf16 MXU inputs, f32 accumulation in VMEM.
    acc_ref[...] += jnp.dot(x_ref[...], w1_ref[...], preferred_element_type=jnp.float32)

    @pl.when(k == pl.num_programs(1) - 1)
    def _():
        h = acc_ref[...] + b1_ref[...]            # bias in f32
        h = jnp.where(h > 0, h, 0.1 * h)          # LeakyReLU(0.1), f32 epilogue
        out = jnp.dot(h.astype(w2_ref.dtype), w2_ref[...],
                      preferred_element_type=jnp.float32) + b2_ref[...]
        o_ref[...] = out.astype(o_ref.dtype)


def prepare_detection_head_params(w1, b1, w2, b2):
    """One-time weight repack (perf item #1): zero-pad to lane-aligned shapes and cast the big
    matrices to bf16.  Call once at model-load time; the per-call path only touches x.

    w1: (in_features, mid)  b1: (mid,)  w2: (mid, out_features)  b2: (out_features,)
    """
    in_features, mid = w1.shape
    out_features = w2.shape[1]
    plan = _plan_tiling(in_features, mid, out_features)
    k_pad, mid_pad, out_pad = plan["k_pad"], plan["mid_pad"], plan["out_pad"]

    w1_p = jnp.zeros((k_pad, mid_pad), jnp.bfloat16).at[:in_features, :mid].set(
        w1.astype(jnp.bfloat16))
    b1_p = jnp.zeros((1, mid_pad), jnp.float32).at[:, :mid].set(b1.astype(jnp.float32))
    w2_p = jnp.zeros((mid_pad, out_pad), jnp.bfloat16).at[:mid, :out_features].set(
        w2.astype(jnp.bfloat16))
    b2_p = jnp.zeros((1, out_pad), jnp.float32).at[:, :out_features].set(
        b2.astype(jnp.float32))
    # Future: quantize w1 to int8 (v5e/v6e MXU) or fp8-e4m3 (v7x MXU) to halve streamed bytes.
    return dict(w1=w1_p, b1=b1_p, w2=w2_p, b2=b2_p,
                in_features=in_features, mid=mid, out_features=out_features, plan=plan)


def yolo_v1_detection_head(x, params):
    """x: (N, C_backbone, S, S) float32 (NCHW, as fed to PyTorch nn.Flatten).
    params: output of prepare_detection_head_params.  Returns (N, S*S*(C+5B)) float32."""
    plan = params["plan"]
    in_features = params["in_features"]
    out_features = params["out_features"]
    tk, k_pad = plan["tk"], plan["k_pad"]
    mid_pad, out_pad = plan["mid_pad"], plan["out_pad"]

    n = x.shape[0]
    assert x.shape[1] * x.shape[2] * x.shape[3] == in_features

    # M tiling: cover as much of the batch as possible per weight pass — w1 is re-streamed
    # from HBM once per M tile and this op is weight-bandwidth bound.
    tm = _round_up(n, 8) if n <= 512 else 512
    n_pad = _round_up(n, tm)
    n_m = n_pad // tm
    n_k = k_pad // tk

    # Per-call activation prep only (weights were repacked once in prepare_*).
    x_flat = x.reshape(n, in_features)
    x_p = jnp.zeros((n_pad, k_pad), jnp.bfloat16).at[:n, :in_features].set(
        x_flat.astype(jnp.bfloat16))

    w1_p, b1_p, w2_p, b2_p = params["w1"], params["b1"], params["w2"], params["b2"]

    # Cost hint: w1 is re-streamed once per M tile; everything else moves once.
    cost = pl.CostEstimate(
        flops=2 * n_pad * (k_pad * mid_pad + mid_pad * out_pad),
        transcendentals=0,
        bytes_accessed=(x_p.size * 2 + n_m * w1_p.size * 2 + w2_p.size * 2
                        + b1_p.size * 4 + b2_p.size * 4 + n_pad * out_pad * 4),
    )

    if n_k == 1:
        # Fast path: whole K in one block -> single fused step per M tile (no accumulator
        # scratch, no pl.when, no per-K grid-step overhead).
        grid_spec = pltpu.PrefetchScalarGridSpec(
            num_scalar_prefetch=0,
            grid=(n_m,),
            in_specs=[
                pl.BlockSpec((tm, k_pad), lambda m: (m, 0)),            # x tile
                pl.BlockSpec((k_pad, mid_pad), lambda m: (0, 0)),       # w1 (resident)
                pl.BlockSpec((1, mid_pad), lambda m: (0, 0)),           # b1
                pl.BlockSpec((mid_pad, out_pad), lambda m: (0, 0)),     # w2 (resident)
                pl.BlockSpec((1, out_pad), lambda m: (0, 0)),           # b2
            ],
            out_specs=pl.BlockSpec((tm, out_pad), lambda m: (m, 0)),
        )
        kernel = _head_kernel_fused
        dim_sem = ("parallel",)
    else:
        # Streamed path: w1 K-tiles double-buffered through VMEM; a *large* resident w2 is
        # single-buffered (its block index never changes) to free VMEM on 64 MiB/TC parts.
        w2_kwargs = {}
        if mid_pad * out_pad * 2 >= (4 << 20):
            w2_kwargs["pipeline_mode"] = pl.Buffered(1)
        grid_spec = pltpu.PrefetchScalarGridSpec(
            num_scalar_prefetch=0,
            grid=(n_m, n_k),
            in_specs=[
                pl.BlockSpec((tm, tk), lambda m, k: (m, k)),            # x tile
                pl.BlockSpec((tk, mid_pad), lambda m, k: (k, 0),        # streamed w1 K-tile
                             pipeline_mode=pl.Buffered(2)),
                pl.BlockSpec((1, mid_pad), lambda m, k: (0, 0)),        # b1 (resident)
                pl.BlockSpec((mid_pad, out_pad), lambda m, k: (0, 0),   # w2 (resident)
                             **w2_kwargs),
                pl.BlockSpec((1, out_pad), lambda m, k: (0, 0)),        # b2 (resident)
            ],
            out_specs=pl.BlockSpec((tm, out_pad), lambda m, k: (m, 0)),
            scratch_shapes=[pltpu.VMEM((tm, mid_pad), jnp.float32)],    # f32 accumulator
        )
        kernel = _head_kernel_ktiled
        dim_sem = ("parallel", "arbitrary")
        # Future (v7x, n_m == 1): add a parallel split over mid (two half-w1 passes, partials
        # summed in the wrapper) so both TensorCores stream disjoint halves of w1.

    out_p = pl.pallas_call(
        kernel,
        out_shape=jax.ShapeDtypeStruct((n_pad, out_pad), jnp.float32),
        grid_spec=grid_spec,
        compiler_params=pltpu.CompilerParams(
            dimension_semantics=dim_sem,
            vmem_limit_bytes=plan["vmem_limit"],
        ),
        cost_estimate=cost,
    )(x_p, w1_p, b1_p, w2_p, b2_p)

    return out_p[:n, :out_features]


def _reference(x, w1, b1, w2, b2):
    h = x.reshape(x.shape[0], -1) @ w1 + b1
    h = jnp.where(h > 0, h, 0.1 * h)
    return h @ w2 + b2


def _run_case(key, batch, backbone_out_channels, S, C, B, mid_features):
    in_features = backbone_out_channels * S * S
    out_features = S * S * (C + B * 5)
    kx, kw1, kb1, kw2, kb2 = jax.random.split(key, 5)

    x = jax.random.normal(kx, (batch, backbone_out_channels, S, S), dtype=jnp.float32)

    # Deterministic PyTorch-Linear-like fan-in init.
    bound1 = 1.0 / jnp.sqrt(in_features)
    w1 = jax.random.uniform(kw1, (in_features, mid_features), jnp.float32, -bound1, bound1)
    b1 = jax.random.uniform(kb1, (mid_features,), jnp.float32, -bound1, bound1)
    bound2 = 1.0 / jnp.sqrt(mid_features)
    w2 = jax.random.uniform(kw2, (mid_features, out_features), jnp.float32, -bound2, bound2)
    b2 = jax.random.uniform(kb2, (out_features,), jnp.float32, -bound2, bound2)

    params = prepare_detection_head_params(w1, b1, w2, b2)   # one-time weight repack
    out = yolo_v1_detection_head(x, params)
    jax.block_until_ready(out)

    ref = _reference(x, w1, b1, w2, b2)
    assert out.shape == (batch, out_features), out.shape
    max_err = float(jnp.max(jnp.abs(out - ref)))
    # bf16 weight/activation streaming vs f32 reference -> widened tolerance.
    assert jnp.allclose(out, ref, atol=3e-2, rtol=3e-2), f"mismatch vs reference: {max_err}"


if __name__ == "__main__":
    key = jax.random.PRNGKey(0)
    k1, k2 = jax.random.split(key)
    # Canonical small YOLOv1 head (S=7, C=3, B=2, mid=256): K fits one block -> fused fast path.
    _run_case(k1, batch=2, backbone_out_channels=4, S=7, C=3, B=2, mid_features=256)
    # Larger in_features (48*7*7 = 2352 > tk) so the streamed K-tiled accumulator path runs too.
    _run_case(k2, batch=4, backbone_out_channels=48, S=7, C=3, B=2, mid_features=256)
    print("KERNEL_OK")
</pallas_src>

<mosaic_0001>
module attributes {stable_mosaic.version = 11 : i64} {
  func.func @_head_kernel_fused(%arg0: i32, %arg1: memref<8x256xbf16, #tpu.memory_space<vmem>>, %arg2: memref<256x256xbf16, #tpu.memory_space<vmem>>, %arg3: memref<1x256xf32, #tpu.memory_space<vmem>>, %arg4: memref<256x640xbf16, #tpu.memory_space<vmem>>, %arg5: memref<1x640xf32, #tpu.memory_space<vmem>>, %arg6: memref<8x640xf32, #tpu.memory_space<vmem>>) attributes {dimension_semantics = [#tpu.dimension_semantics<parallel>], iteration_bounds = array<i64: 1>, scalar_prefetch = 0 : i64, scratch_operands = 0 : i64, tpu.core_type = #tpu.core_type<tc>, window_params = [{transform_indices = @transform_0, window_bounds = array<i64: 8, 256>}, {pipeline_mode = #tpu.pipeline_mode<synchronous>, transform_indices = @transform_1, window_bounds = array<i64: 256, 256>}, {pipeline_mode = #tpu.pipeline_mode<synchronous>, transform_indices = @transform_2, window_bounds = array<i64: 1, 256>}, {pipeline_mode = #tpu.pipeline_mode<synchronous>, transform_indices = @transform_3, window_bounds = array<i64: 256, 640>}, {pipeline_mode = #tpu.pipeline_mode<synchronous>, transform_indices = @transform_4, window_bounds = array<i64: 1, 640>}, {transform_indices = @transform_5, window_bounds = array<i64: 8, 640>}]} {
    %c0 = arith.constant 0 : index
    %c0_0 = arith.constant 0 : index
    %0 = vector.load %arg1[%c0, %c0_0] : memref<8x256xbf16, #tpu.memory_space<vmem>>, vector<8x256xbf16>
    %c0_1 = arith.constant 0 : index
    %c0_2 = arith.constant 0 : index
    %1 = vector.load %arg2[%c0_1, %c0_2] : memref<256x256xbf16, #tpu.memory_space<vmem>>, vector<256x256xbf16>
    %cst = arith.constant dense<0.000000e+00> : vector<8x256xf32>
    %2 = tpu.matmul %0, %1, %cst {dimension_numbers = #tpu.dot_dimension_numbers<[1], [0], [0], [1], [0, 0, 1, 1], [], []>} : vector<8x256xbf16>, vector<256x256xbf16>, vector<8x256xf32> -> vector<8x256xf32>
    %c0_3 = arith.constant 0 : index
    %c0_4 = arith.constant 0 : index
    %3 = vector.load %arg3[%c0_3, %c0_4] : memref<1x256xf32, #tpu.memory_space<vmem>>, vector<1x256xf32>
    %4 = vector.broadcast %3 : vector<1x256xf32> to vector<8x256xf32>
    %5 = arith.addf %2, %4 : vector<8x256xf32>
    %cst_5 = arith.constant 0.000000e+00 : f32
    %6 = vector.broadcast %cst_5 : f32 to vector<8x256xf32>
    %7 = arith.cmpf ogt, %5, %6 : vector<8x256xf32>
    %cst_6 = arith.constant 1.000000e-01 : f32
    %8 = vector.broadcast %cst_6 : f32 to vector<8x256xf32>
    %9 = arith.mulf %8, %5 : vector<8x256xf32>
    %10 = arith.select %7, %5, %9 : vector<8x256xi1>, vector<8x256xf32>
    %11 = arith.truncf %10 : vector<8x256xf32> to vector<8x256xbf16>
    %c0_7 = arith.constant 0 : index
    %c0_8 = arith.constant 0 : index
    %12 = vector.load %arg4[%c0_7, %c0_8] : memref<256x640xbf16, #tpu.memory_space<vmem>>, vector<256x640xbf16>
    %cst_9 = arith.constant dense<0.000000e+00> : vector<8x640xf32>
    %13 = tpu.matmul %11, %12, %cst_9 {dimension_numbers = #tpu.dot_dimension_numbers<[1], [0], [0], [1], [0, 0, 1, 1], [], []>} : vector<8x256xbf16>, vector<256x640xbf16>, vector<8x640xf32> -> vector<8x640xf32>
    %c0_10 = arith.constant 0 : index
    %c0_11 = arith.constant 0 : index
    %14 = vector.load %arg5[%c0_10, %c0_11] : memref<1x640xf32, #tpu.memory_space<vmem>>, vector<1x640xf32>
    %15 = vector.broadcast %14 : vector<1x640xf32> to vector<8x640xf32>
    %16 = arith.addf %13, %15 : vector<8x640xf32>
    %c0_12 = arith.constant 0 : index
    %c0_13 = arith.constant 0 : index
    %17 = vector.load %arg6[%c0_12, %c0_13] : memref<8x640xf32, #tpu.memory_space<vmem>>, vector<8x640xf32>
    tpu.vector_store %arg6[%c0_12, %c0_13], %16 {strides = array<i32>} : memref<8x640xf32, #tpu.memory_space<vmem>>, vector<8x640xf32>,
    return
  }
  func.func @transform_0(%arg0: i32) -> (i32, i32) {
    %c0_i32 = arith.constant 0 : i32
    %c0_i32_0 = arith.constant 0 : i32
    return %arg0, %c0_i32 : i32, i32
  }
  func.func @transform_1(%arg0: i32) -> (i32, i32) {
    %c0_i32 = arith.constant 0 : i32
    %c0_i32_0 = arith.constant 0 : i32
    %c0_i32_1 = arith.constant 0 : i32
    return %c0_i32, %c0_i32_0 : i32, i32
  }
  func.func @transform_2(%arg0: i32) -> (i32, i32) {
    %c0_i32 = arith.constant 0 : i32
    %c0_i32_0 = arith.constant 0 : i32
    %c0_i32_1 = arith.constant 0 : i32
    return %c0_i32, %c0_i32_0 : i32, i32
  }
  func.func @transform_3(%arg0: i32) -> (i32, i32) {
    %c0_i32 = arith.constant 0 : i32
    %c0_i32_0 = arith.constant 0 : i32
    %c0_i32_1 = arith.constant 0 : i32
    return %c0_i32, %c0_i32_0 : i32, i32
  }
  func.func @transform_4(%arg0: i32) -> (i32, i32) {
    %c0_i32 = arith.constant 0 : i32
    %c0_i32_0 = arith.constant 0 : i32
    %c0_i32_1 = arith.constant 0 : i32
    return %c0_i32, %c0_i32_0 : i32, i32
  }
  func.func @transform_5(%arg0: i32) -> (i32, i32) {
    %c0_i32 = arith.constant 0 : i32
    %c0_i32_0 = arith.constant 0 : i32
    return %arg0, %c0_i32 : i32, i32
  }
}

</mosaic_0001>

<llo_original>
// kernel: tpu_custom_call.1
$region0: #{tpu_custom_call.1}
  #allocation0 [shape = 'u32[]', space=smem, size = 0x4, offset = 0x4, fixed_abs, tag = 'smem constant byte address 0x4 - core index']
  #allocation1 [shape = 'u32[144,128]{1,0:T(1,128)}', space=vmem, size = 0x12000, scoped, tag = 'internal scratch']
  %s0 = inlined_call_operand.hbm [shape: bf16[8,256], index: 0, kind: input, shape index: {}]
  %s1 = inlined_call_operand.hbm [shape: bf16[256,256], index: 1, kind: input, shape index: {}]
  %s2 = inlined_call_operand.vmem [shape: f32[1,256], index: 2, kind: input, shape index: {}]
  %s3 = inlined_call_operand.hbm [shape: bf16[256,640], index: 3, kind: input, shape index: {}]
  %s4 = inlined_call_operand.vmem [shape: f32[1,640], index: 4, kind: input, shape index: {}]
  %s5 = inlined_call_operand.hbm [shape: f32[8,640], index: 5, kind: output, shape index: {}]
  %s6 = sld [smem:[#allocation0]]
  $region42: #{tpu_custom_call.1} parent=0
    _
  %s8 = ssub.s32 1, %s6
  %s9 = scalar_select 0, %s8, %s6
  $region1: #{tpu_custom_call.1} parent=0
    #allocation2 [shape = 'u8[4096]{0}', space=vmem, size = 0x1000, scoped, tag = 'input window, operand 0, single buffered']
    #allocation3 [shape = 's32[1]{0}', space=sflag, size = 0x4, scoped, tag = 'scoped memory for tpu_custom_call.1']
    #allocation4 [shape = 's32[1]{0}', space=sflag, size = 0x4, scoped, tag = 'scoped memory for tpu_custom_call.1']
    #allocation5 [shape = 'u8[131072]{0}', space=vmem, size = 0x20000, scoped, tag = 'input window, operand 1, single buffered']
    #allocation6 [shape = 's32[1]{0}', space=sflag, size = 0x4, scoped, tag = 'scoped memory for tpu_custom_call.1']
    #allocation7 [shape = 'u8[327680]{0}', space=vmem, size = 0x50000, scoped, tag = 'input window, operand 3, single buffered']
    #allocation8 [shape = 'u8[20480]{0}', space=vmem, size = 0x5000, scoped, tag = 'output window, operand 0, single buffered']
    %10 = vsyncpa [#allocation3], 0
    %11 = vsyncpa [#allocation6], 0
    %12 = vsyncpa [#allocation4], 0
    // Predicated region
    $region2: #{tpu_custom_call.1} parent=1 // pred_check
      _
    $region3: #{tpu_custom_call.1} parent=1 // pred_check_branch
      %14 = sbr.rel (0) target = $region5
    $region4: #{tpu_custom_call.1} parent=1 // pred_region
      %s16 = ssub.s32 128, 128
      %17 = vsyncadd [#allocation3], %s16
      %s19 = sshll.u32 [#allocation2], 4
      %s20 = int_to_ptr.vmem [resolvable:$true] %s19
      %22 = dma.hbm_to_vmem [thread:$0]  %s0, 128, %s20, [#allocation3]
    $region5: #{tpu_custom_call.1} parent=1 // pred_fallthru
      _
    // Predicated region
    $region6: #{tpu_custom_call.1} parent=1 // pred_check
      _
    $region7: #{tpu_custom_call.1} parent=1 // pred_check_branch
      %24 = sbr.rel (0) target = $region9
    $region8: #{tpu_custom_call.1} parent=1 // pred_region
      %s26 = ssub.s32 4096, 4096
      %27 = vsyncadd [#allocation6], %s26
      %s28 = sshll.u32 [#allocation5], 4
      %s29 = int_to_ptr.vmem [resolvable:$true] %s28
      %34 = dma.hbm_to_vmem [thread:$0]  %s1, 4096, %s29, [#allocation6], 128, 128, 8
    $region9: #{tpu_custom_call.1} parent=1 // pred_fallthru
      _
    // Predicated region
    $region10: #{tpu_custom_call.1} parent=1 // pred_check
      _
    $region11: #{tpu_custom_call.1} parent=1 // pred_check_branch
      %36 = sbr.rel (0) target = $region13
    $region12: #{tpu_custom_call.1} parent=1 // pred_region
      _
    $region13: #{tpu_custom_call.1} parent=1 // pred_fallthru
      _
    // Predicated region
    $region14: #{tpu_custom_call.1} parent=1 // pred_check
      _
    $region15: #{tpu_custom_call.1} parent=1 // pred_check_branch
      %38 = sbr.rel (0) target = $region17
    $region16: #{tpu_custom_call.1} parent=1 // pred_region
      %s40 = ssub.s32 10240, 10240
      %41 = vsyncadd [#allocation6], %s40
      %s42 = sshll.u32 [#allocation7], 4
      %s43 = int_to_ptr.vmem [resolvable:$true] %s42
      %48 = dma.hbm_to_vmem [thread:$0]  %s3, 10240, %s43, [#allocation6], 320, 320, 20
    $region17: #{tpu_custom_call.1} parent=1 // pred_fallthru
      _
    // Predicated region
    $region18: #{tpu_custom_call.1} parent=1 // pred_check
      _
    $region19: #{tpu_custom_call.1} parent=1 // pred_check_branch
      %50 = sbr.rel (0) target = $region21
    $region20: #{tpu_custom_call.1} parent=1 // pred_region
      _
    $region21: #{tpu_custom_call.1} parent=1 // pred_fallthru
      _
    // Predicated region
    $region22: #{tpu_custom_call.1} parent=1 // pred_check
      _
    $region23: #{tpu_custom_call.1} parent=1 // pred_check_branch
      %52 = sbr.rel (0) target = $region25
    $region24: #{tpu_custom_call.1} parent=1 // pred_region
      %53 = dma.done [#allocation3], 128
    $region25: #{tpu_custom_call.1} parent=1 // pred_fallthru
      _
    // Predicated region
    $region26: #{tpu_custom_call.1} parent=1 // pred_check
      _
    $region27: #{tpu_custom_call.1} parent=1 // pred_check_branch
      %55 = sbr.rel (0) target = $region29
    $region28: #{tpu_custom_call.1} parent=1 // pred_region
      %56 = dma.done [#allocation6], 4096
    $region29: #{tpu_custom_call.1} parent=1 // pred_fallthru
      _
    // Predicated region
    $region30: #{tpu_custom_call.1} parent=1 // pred_check
      _
    $region31: #{tpu_custom_call.1} parent=1 // pred_check_branch
      %58 = sbr.rel (0) target = $region33
    $region32: #{tpu_custom_call.1} parent=1 // pred_region
      %59 = dma.done [#allocation6], 10240
    $region33: #{tpu_custom_call.1} parent=1 // pred_fallthru
      _
    %v61 = vld [vmem:[#allocation2] sm:$0xff]
    %v62 = vld [vmem:[#allocation5] sm:$0xff]
    %v63 = vld [vmem:[#allocation5 + $0x8] sm:$0xff]
    %v64 = vld [vmem:[#allocation5 + $0x10] sm:$0xff]
    %v65 = vld [vmem:[#allocation5 + $0x18] sm:$0xff]
    %v66 = vld [vmem:[#allocation5 + $0x20] sm:$0xff]
    %v67 = vld [vmem:[#allocation5 + $0x28] sm:$0xff]
    %v68 = vld [vmem:[#allocation5 + $0x30] sm:$0xff]
    %v69 = vld [vmem:[#allocation5 + $0x38] sm:$0xff]
    %v70 = vld [vmem:[#allocation5 + $0x40] sm:$0xff]
    %v71 = vld [vmem:[#allocation5 + $0x48] sm:$0xff]
    %v72 = vld [vmem:[#allocation5 + $0x50] sm:$0xff]
    %v73 = vld [vmem:[#allocation5 + $0x58] sm:$0xff]
    %v74 = vld [vmem:[#allocation5 + $0x60] sm:$0xff]
    %v75 = vld [vmem:[#allocation5 + $0x68] sm:$0xff]
    %v76 = vld [vmem:[#allocation5 + $0x70] sm:$0xff]
    %v77 = vld [vmem:[#allocation5 + $0x78] sm:$0xff]
    %v78 = vld [vmem:[#allocation5 + $0x80] sm:$0xff]
    %v79 = vld [vmem:[#allocation5 + $0x88] sm:$0xff]
    %v80 = vld [vmem:[#allocation5 + $0x90] sm:$0xff]
    %v81 = vld [vmem:[#allocation5 + $0x98] sm:$0xff]
    %v82 = vld [vmem:[#allocation5 + $0xa0] sm:$0xff]
    %v83 = vld [vmem:[#allocation5 + $0xa8] sm:$0xff]
    %v84 = vld [vmem:[#allocation5 + $0xb0] sm:$0xff]
    %v85 = vld [vmem:[#allocation5 + $0xb8] sm:$0xff]
    %v86 = vld [vmem:[#allocation5 + $0xc0] sm:$0xff]
    %v87 = vld [vmem:[#allocation5 + $0xc8] sm:$0xff]
    %v88 = vld [vmem:[#allocation5 + $0xd0] sm:$0xff]
    %v89 = vld [vmem:[#allocation5 + $0xd8] sm:$0xff]
    %v90 = vld [vmem:[#allocation5 + $0xe0] sm:$0xff]
    %v91 = vld [vmem:[#allocation5 + $0xe8] sm:$0xff]
    %v92 = vld [vmem:[#allocation5 + $0xf0] sm:$0xff]
    %v93 = vld [vmem:[#allocation5 + $0xf8] sm:$0xff]
    %v94 = vld [vmem:[%s2] sm:$0x3]
    %v96 = vlaneseq
    %v97 = vshrl.u32 %v96, 7
    %v98 = vsub.s32 0, %v97
    %v99 = vrot.slane %v94, %v98
    %v100 = vlaneseq
    %v101 = vshrl.u32 %v100, 7
    %v102 = vsub.s32 1, %v101
    %v103 = vrot.slane %v94, %v102
    %v107 = vunpack.c.l.b16 %v61
    %v108 = vunpack.c.h.b16 %v61
    %v109 = vpack.c.b16 %v107, %v107
    %v110 = vpack.c.b16 %v108, %v108
    %v145 = vunpack.c.l.b16 %v62
    %v146 = vunpack.c.h.b16 %v62
    %v147 = vunpack.c.l.b16 %v63
    %v148 = vunpack.c.h.b16 %v63
    %v149 = vunpack.c.l.b16 %v64
    %v150 = vunpack.c.h.b16 %v64
    %v151 = vunpack.c.l.b16 %v65
    %v152 = vunpack.c.h.b16 %v65
    %v153 = vunpack.c.l.b16 %v66
    %v154 = vunpack.c.h.b16 %v66
    %v155 = vunpack.c.l.b16 %v67
    %v156 = vunpack.c.h.b16 %v67
    %v157 = vunpack.c.l.b16 %v68
    %v158 = vunpack.c.h.b16 %v68
    %v159 = vunpack.c.l.b16 %v69
    %v160 = vunpack.c.h.b16 %v69
    %v161 = vunpack.c.l.b16 %v70
    %v162 = vunpack.c.h.b16 %v70
    %v163 = vunpack.c.l.b16 %v71
    %v164 = vunpack.c.h.b16 %v71
    %v165 = vunpack.c.l.b16 %v72
    %v166 = vunpack.c.h.b16 %v72
    %v167 = vunpack.c.l.b16 %v73
    %v168 = vunpack.c.h.b16 %v73
    %v169 = vunpack.c.l.b16 %v74
    %v170 = vunpack.c.h.b16 %v74
    %v171 = vunpack.c.l.b16 %v75
    %v172 = vunpack.c.h.b16 %v75
    %v173 = vunpack.c.l.b16 %v76
    %v174 = vunpack.c.h.b16 %v76
    %v175 = vunpack.c.l.b16 %v77
    %v176 = vunpack.c.h.b16 %v77
    %v177 = vunpack.c.l.b16 %v78
    %v178 = vunpack.c.h.b16 %v78
    %v179 = vunpack.c.l.b16 %v79
    %v180 = vunpack.c.h.b16 %v79
    %v181 = vunpack.c.l.b16 %v80
    %v182 = vunpack.c.h.b16 %v80
    %v183 = vunpack.c.l.b16 %v81
    %v184 = vunpack.c.h.b16 %v81
    %v185 = vunpack.c.l.b16 %v82
    %v186 = vunpack.c.h.b16 %v82
    %v187 = vunpack.c.l.b16 %v83
    %v188 = vunpack.c.h.b16 %v83
    %v189 = vunpack.c.l.b16 %v84
    %v190 = vunpack.c.h.b16 %v84
    %v191 = vunpack.c.l.b16 %v85
    %v192 = vunpack.c.h.b16 %v85
    %v193 = vunpack.c.l.b16 %v86
    %v194 = vunpack.c.h.b16 %v86
    %v195 = vunpack.c.l.b16 %v87
    %v196 = vunpack.c.h.b16 %v87
    %v197 = vunpack.c.l.b16 %v88
    %v198 = vunpack.c.h.b16 %v88
    %v199 = vunpack.c.l.b16 %v89
    %v200 = vunpack.c.h.b16 %v89
    %v201 = vunpack.c.l.b16 %v90
    %v202 = vunpack.c.h.b16 %v90
    %v203 = vunpack.c.l.b16 %v91
    %v204 = vunpack.c.h.b16 %v91
    %v205 = vunpack.c.l.b16 %v92
    %v206 = vunpack.c.h.b16 %v92
    %v207 = vunpack.c.l.b16 %v93
    %v208 = vunpack.c.h.b16 %v93
    %v209 = vpack.c.b16 %v147, %v145
    %v210 = vpack.c.b16 %v148, %v146
    %v211 = vpack.c.b16 %v151, %v149
    %v212 = vpack.c.b16 %v152, %v150
    %v213 = vpack.c.b16 %v155, %v153
    %v214 = vpack.c.b16 %v156, %v154
    %v215 = vpack.c.b16 %v159, %v157
    %v216 = vpack.c.b16 %v160, %v158
    %v217 = vpack.c.b16 %v163, %v161
    %v218 = vpack.c.b16 %v164, %v162
    %v219 = vpack.c.b16 %v167, %v165
    %v220 = vpack.c.b16 %v168, %v166
    %v221 = vpack.c.b16 %v171, %v169
    %v222 = vpack.c.b16 %v172, %v170
    %v223 = vpack.c.b16 %v175, %v173
    %v224 = vpack.c.b16 %v176, %v174
    %v225 = vpack.c.b16 %v179, %v177
    %v226 = vpack.c.b16 %v180, %v178
    %v227 = vpack.c.b16 %v183, %v181
    %v228 = vpack.c.b16 %v184, %v182
    %v229 = vpack.c.b16 %v187, %v185
    %v230 = vpack.c.b16 %v188, %v186
    %v231 = vpack.c.b16 %v191, %v189
    %v232 = vpack.c.b16 %v192, %v190
    %v233 = vpack.c.b16 %v195, %v193
    %v234 = vpack.c.b16 %v196, %v194
    %v235 = vpack.c.b16 %v199, %v197
    %v236 = vpack.c.b16 %v200, %v198
    %v237 = vpack.c.b16 %v203, %v201
    %v238 = vpack.c.b16 %v204, %v202
    %v239 = vpack.c.b16 %v207, %v205
    %v240 = vpack.c.b16 %v208, %v206
    %273 = vmatprep.subr.bf16.mxu0 %v210
    %274 = vmatpush1.bf16.msra.mxu0 %v209
    %275 = vmatprep.subr.bf16.mxu0 %v212
    %276 = vmatpush1.bf16.msra.mxu0 %v211
    %277 = vmatprep.subr.bf16.mxu0 %v214
    %278 = vmatpush1.bf16.msra.mxu0 %v213
    %279 = vmatprep.subr.bf16.mxu0 %v216
    %280 = vmatpush1.bf16.msra.mxu0 %v215
    %281 = vmatprep.subr.bf16.mxu0 %v218
    %282 = vmatpush1.bf16.msra.mxu0 %v217
    %283 = vmatprep.subr.bf16.mxu0 %v220
    %284 = vmatpush1.bf16.msra.mxu0 %v219
    %285 = vmatprep.subr.bf16.mxu0 %v222
    %286 = vmatpush1.bf16.msra.mxu0 %v221
    %287 = vmatprep.subr.bf16.mxu0 %v224
    %288 = vmatpush1.bf16.msra.mxu0 %v223
    %289 = vmatprep.subr.bf16.mxu0 %v226
    %290 = vmatpush1.bf16.msra.mxu0 %v225
    %291 = vmatprep.subr.bf16.mxu0 %v228
    %292 = vmatpush1.bf16.msra.mxu0 %v227
    %293 = vmatprep.subr.bf16.mxu0 %v230
    %294 = vmatpush1.bf16.msra.mxu0 %v229
    %295 = vmatprep.subr.bf16.mxu0 %v232
    %296 = vmatpush1.bf16.msra.mxu0 %v231
    %297 = vmatprep.subr.bf16.mxu0 %v234
    %298 = vmatpush1.bf16.msra.mxu0 %v233
    %299 = vmatprep.subr.bf16.mxu0 %v236
    %300 = vmatpush1.bf16.msra.mxu0 %v235
    %301 = vmatprep.subr.bf16.mxu0 %v238
    %302 = vmatpush1.bf16.msra.mxu0 %v237
    %303 = vmatprep.subr.bf16.mxu0 %v240
    %304 = vmatpush1.bf16.msra.mxu0 %v239
    %305 = vmatprep.mubr.bf16.mxu0 %v110
    %306 = vmatmul.mubr.bf16.gmra.mrb[0].mxu0 %v109
    %v307 = vpop.f32.mrb[0].mxu0
    %v308 = vadd.f32 %v99, %v307
    %v309 = vpop.f32.mrb[0].mxu0
    %v310 = vadd.f32 %v103, %v309
    %v311 = vpop.f32.mrb[0].mxu0
    %v312 = vpop.f32.mrb[0].mxu0
    %313 = vdwg.mxu0
    %vm314 = vcmp.gt.f32.partialorder %v308, 0.0
    %vm315 = vcmp.gt.f32.partialorder %v310, 0.0
    %v316 = vmul.f32 %v308, 0.1
    %v317 = vmul.f32 %v310, 0.1
    %v318 = vsel %vm314, %v308, %v316
    %v319 = vsel %vm315, %v310, %v317
    %v320 = vpack.c.bf16 %v318, %v318
    %v321 = vpack.c.bf16 %v319, %v319
    %v322 = vld [vmem:[#allocation7] sm:$0xff]
    %v323 = vld [vmem:[#allocation7 + $0x8] sm:$0xff]
    %v324 = vld [vmem:[#allocation7 + $0x10] sm:$0xf]
    %v325 = vld [vmem:[#allocation7 + $0x14] sm:$0xff]
    %v326 = vld [vmem:[#allocation7 + $0x1c] sm:$0xff]
    %v327 = vld [vmem:[#allocation7 + $0x24] sm:$0xf]
    %v328 = vld [vmem:[#allocation7 + $0x28] sm:$0xff]
    %v329 = vld [vmem:[#allocation7 + $0x30] sm:$0xff]
    %v330 = vld [vmem:[#allocation7 + $0x38] sm:$0xf]
    %v331 = vld [vmem:[#allocation7 + $0x3c] sm:$0xff]
    %v332 = vld [vmem:[#allocation7 + $0x44] sm:$0xff]
    %v333 = vld [vmem:[#allocation7 + $0x4c] sm:$0xf]
    %v334 = vld [vmem:[#allocation7 + $0x50] sm:$0xff]
    %v335 = vld [vmem:[#allocation7 + $0x58] sm:$0xff]
    %v336 = vld [vmem:[#allocation7 + $0x60] sm:$0xf]
    %v337 = vld [vmem:[#allocation7 + $0x64] sm:$0xff]
    %v338 = vld [vmem:[#allocation7 + $0x6c] sm:$0xff]
    %v339 = vld [vmem:[#allocation7 + $0x74] sm:$0xf]
    %v340 = vld [vmem:[#allocation7 + $0x78] sm:$0xff]
    %v341 = vld [vmem:[#allocation7 + $0x80] sm:$0xff]
    %v342 = vld [vmem:[#allocation7 + $0x88] sm:$0xf]
    %v343 = vld [vmem:[#allocation7 + $0x8c] sm:$0xff]
    %v344 = vld [vmem:[#allocation7 + $0x94] sm:$0xff]
    %v345 = vld [vmem:[#allocation7 + $0x9c] sm:$0xf]
    %v346 = vld [vmem:[#allocation7 + $0xa0] sm:$0xff]
    %v347 = vld [vmem:[#allocation7 + $0xa8] sm:$0xff]
    %v348 = vld [vmem:[#allocation7 + $0xb0] sm:$0xf]
    %v349 = vld [vmem:[#allocation7 + $0xb4] sm:$0xff]
    %v350 = vld [vmem:[#allocation7 + $0xbc] sm:$0xff]
    %v351 = vld [vmem:[#allocation7 + $0xc4] sm:$0xf]
    %v352 = vld [vmem:[#allocation7 + $0xc8] sm:$0xff]
    %v353 = vld [vmem:[#allocation7 + $0xd0] sm:$0xff]
    %v354 = vld [vmem:[#allocation7 + $0xd8] sm:$0xf]
    %v355 = vld [vmem:[#allocation7 + $0xdc] sm:$0xff]
    %v356 = vld [vmem:[#allocation7 + $0xe4] sm:$0xff]
    %v357 = vld [vmem:[#allocation7 + $0xec] sm:$0xf]
    %v358 = vld [vmem:[#allocation7 + $0xf0] sm:$0xff]
    %v359 = vld [vmem:[#allocation7 + $0xf8] sm:$0xff]
    %v360 = vld [vmem:[#allocation7 + $0x100] sm:$0xf]
    %v361 = vld [vmem:[#allocation7 + $0x104] sm:$0xff]
    %v362 = vld [vmem:[#allocation7 + $0x10c] sm:$0xff]
    %v363 = vld [vmem:[#allocation7 + $0x114] sm:$0xf]
    %v364 = vld [vmem:[#allocation7 + $0x118] sm:$0xff]
    %v365 = vld [vmem:[#allocation7 + $0x120] sm:$0xff]
    %v366 = vld [vmem:[#allocation7 + $0x128] sm:$0xf]
    %v367 = vld [vmem:[#allocation7 + $0x12c] sm:$0xff]
    %v368 = vld [vmem:[#allocation7 + $0x134] sm:$0xff]
    %v369 = vld [vmem:[#allocation7 + $0x13c] sm:$0xf]
    %v370 = vld [vmem:[#allocation7 + $0x140] sm:$0xff]
    %v371 = vld [vmem:[#allocation7 + $0x148] sm:$0xff]
    %v372 = vld [vmem:[#allocation7 + $0x150] sm:$0xf]
    %v373 = vld [vmem:[#allocation7 + $0x154] sm:$0xff]
    %v374 = vld [vmem:[#allocation7 + $0x15c] sm:$0xff]
    %v375 = vld [vmem:[#allocation7 + $0x164] sm:$0xf]
    %v376 = vld [vmem:[#allocation7 + $0x168] sm:$0xff]
    %v377 = vld [vmem:[#allocation7 + $0x170] sm:$0xff]
    %v378 = vld [vmem:[#allocation7 + $0x178] sm:$0xf]
    %v379 = vld [vmem:[#allocation7 + $0x17c] sm:$0xff]
    %v380 = vld [vmem:[#allocation7 + $0x184] sm:$0xff]
    %v381 = vld [vmem:[#allocation7 + $0x18c] sm:$0xf]
    %v382 = vld [vmem:[#allocation7 + $0x190] sm:$0xff]
    %v383 = vld [vmem:[#allocation7 + $0x198] sm:$0xff]
    %v384 = vld [vmem:[#allocation7 + $0x1a0] sm:$0xf]
    %v385 = vld [vmem:[#allocation7 + $0x1a4] sm:$0xff]
    %v386 = vld [vmem:[#allocation7 + $0x1ac] sm:$0xff]
    %v387 = vld [vmem:[#allocation7 + $0x1b4] sm:$0xf]
    %v388 = vld [vmem:[#allocation7 + $0x1b8] sm:$0xff]
    %v389 = vld [vmem:[#allocation7 + $0x1c0] sm:$0xff]
    %v390 = vld [vmem:[#allocation7 + $0x1c8] sm:$0xf]
    %v391 = vld [vmem:[#allocation7 + $0x1cc] sm:$0xff]
    %v392 = vld [vmem:[#allocation7 + $0x1d4] sm:$0xff]
    %v393 = vld [vmem:[#allocation7 + $0x1dc] sm:$0xf]
    %v394 = vld [vmem:[#allocation7 + $0x1e0] sm:$0xff]
    %v395 = vld [vmem:[#allocation7 + $0x1e8] sm:$0xff]
    %v396 = vld [vmem:[#allocation7 + $0x1f0] sm:$0xf]
    %v397 = vld [vmem:[#allocation7 + $0x1f4] sm:$0xff]
    %v398 = vld [vmem:[#allocation7 + $0x1fc] sm:$0xff]
    %v399 = vld [vmem:[#allocation7 + $0x204] sm:$0xf]
    %v400 = vld [vmem:[#allocation7 + $0x208] sm:$0xff]
    %v401 = vld [vmem:[#allocation7 + $0x210] sm:$0xff]
    %v402 = vld [vmem:[#allocation7 + $0x218] sm:$0xf]
    %v403 = vld [vmem:[#allocation7 + $0x21c] sm:$0xff]
    %v404 = vld [vmem:[#allocation7 + $0x224] sm:$0xff]
    %v405 = vld [vmem:[#allocation7 + $0x22c] sm:$0xf]
    %v406 = vld [vmem:[#allocation7 + $0x230] sm:$0xff]
    %v407 = vld [vmem:[#allocation7 + $0x238] sm:$0xff]
    %v408 = vld [vmem:[#allocation7 + $0x240] sm:$0xf]
    %v409 = vld [vmem:[#allocation7 + $0x244] sm:$0xff]
    %v410 = vld [vmem:[#allocation7 + $0x24c] sm:$0xff]
    %v411 = vld [vmem:[#allocation7 + $0x254] sm:$0xf]
    %v412 = vld [vmem:[#allocation7 + $0x258] sm:$0xff]
    %v413 = vld [vmem:[#allocation7 + $0x260] sm:$0xff]
    %v414 = vld [vmem:[#allocation7 + $0x268] sm:$0xf]
    %v415 = vld [vmem:[#allocation7 + $0x26c] sm:$0xff]
    %v416 = vld [vmem:[#allocation7 + $0x274] sm:$0xff]
    %v417 = vld [vmem:[#allocation7 + $0x27c] sm:$0xf]
    %v418 = vld [vmem:[%s4] sm:$0x1f]
    %v420 = vlaneseq
    %v421 = vshrl.u32 %v420, 7
    %v422 = vsub.s32 0, %v421
    %v423 = vrot.slane %v418, %v422
    %v424 = vlaneseq
    %v425 = vshrl.u32 %v424, 7
    %v426 = vsub.s32 1, %v425
    %v427 = vrot.slane %v418, %v426
    %v428 = vlaneseq
    %v429 = vshrl.u32 %v428, 7
    %v430 = vsub.s32 2, %v429
    %v431 = vrot.slane %v418, %v430
    %v432 = vlaneseq
    %v433 = vshrl.u32 %v432, 7
    %v434 = vsub.s32 3, %v433
    %v435 = vrot.slane %v418, %v434
    %v436 = vlaneseq
    %v437 = vshrl.u32 %v436, 7
    %v438 = vsub.s32 4, %v437
    %v439 = vrot.slane %v418, %v438
    %v541 = vunpack.c.l.b16 %v322
    %v542 = vunpack.c.h.b16 %v322
    %v543 = vunpack.c.l.b16 %v323
    %v544 = vunpack.c.h.b16 %v323
    %v545 = vunpack.c.l.b16 %v324
    %v546 = vunpack.c.l.b16 %v325
    %v547 = vunpack.c.h.b16 %v325
    %v548 = vunpack.c.l.b16 %v326
    %v549 = vunpack.c.h.b16 %v326
    %v550 = vunpack.c.l.b16 %v327
    %v551 = vunpack.c.l.b16 %v328
    %v552 = vunpack.c.h.b16 %v328
    %v553 = vunpack.c.l.b16 %v329
    %v554 = vunpack.c.h.b16 %v329
    %v555 = vunpack.c.l.b16 %v330
    %v556 = vunpack.c.l.b16 %v331
    %v557 = vunpack.c.h.b16 %v331
    %v558 = vunpack.c.l.b16 %v332
    %v559 = vunpack.c.h.b16 %v332
    %v560 = vunpack.c.l.b16 %v333
    %v561 = vunpack.c.l.b16 %v334
    %v562 = vunpack.c.h.b16 %v334
    %v563 = vunpack.c.l.b16 %v335
    %v564 = vunpack.c.h.b16 %v335
    %v565 = vunpack.c.l.b16 %v336
    %v566 = vunpack.c.l.b16 %v337
    %v567 = vunpack.c.h.b16 %v337
    %v568 = vunpack.c.l.b16 %v338
    %v569 = vunpack.c.h.b16 %v338
    %v570 = vunpack.c.l.b16 %v339
    %v571 = vunpack.c.l.b16 %v340
    %v572 = vunpack.c.h.b16 %v340
    %v573 = vunpack.c.l.b16 %v341
    %v574 = vunpack.c.h.b16 %v341
    %v575 = vunpack.c.l.b16 %v342
    %v576 = vunpack.c.l.b16 %v343
    %v577 = vunpack.c.h.b16 %v343
    %v578 = vunpack.c.l.b16 %v344
    %v579 = vunpack.c.h.b16 %v344
    %v580 = vunpack.c.l.b16 %v345
    %v581 = vunpack.c.l.b16 %v346
    %v582 = vunpack.c.h.b16 %v346
    %v583 = vunpack.c.l.b16 %v347
    %v584 = vunpack.c.h.b16 %v347
    %v585 = vunpack.c.l.b16 %v348
    %v586 = vunpack.c.l.b16 %v349
    %v587 = vunpack.c.h.b16 %v349
    %v588 = vunpack.c.l.b16 %v350
    %v589 = vunpack.c.h.b16 %v350
    %v590 = vunpack.c.l.b16 %v351
    %v591 = vunpack.c.l.b16 %v352
    %v592 = vunpack.c.h.b16 %v352
    %v593 = vunpack.c.l.b16 %v353
    %v594 = vunpack.c.h.b16 %v353
    %v595 = vunpack.c.l.b16 %v354
    %v596 = vunpack.c.l.b16 %v355
    %v597 = vunpack.c.h.b16 %v355
    %v598 = vunpack.c.l.b16 %v356
    %v599 = vunpack.c.h.b16 %v356
    %v600 = vunpack.c.l.b16 %v357
    %v601 = vunpack.c.l.b16 %v358
    %v602 = vunpack.c.h.b16 %v358
    %v603 = vunpack.c.l.b16 %v359
    %v604 = vunpack.c.h.b16 %v359
    %v605 = vunpack.c.l.b16 %v360
    %v606 = vunpack.c.l.b16 %v361
    %v607 = vunpack.c.h.b16 %v361
    %v608 = vunpack.c.l.b16 %v362
    %v609 = vunpack.c.h.b16 %v362
    %v610 = vunpack.c.l.b16 %v363
    %v611 = vunpack.c.l.b16 %v364
    %v612 = vunpack.c.h.b16 %v364
    %v613 = vunpack.c.l.b16 %v365
    %v614 = vunpack.c.h.b16 %v365
    %v615 = vunpack.c.l.b16 %v366
    %v616 = vunpack.c.l.b16 %v367
    %v617 = vunpack.c.h.b16 %v367
    %v618 = vunpack.c.l.b16 %v368
    %v619 = vunpack.c.h.b16 %v368
    %v620 = vunpack.c.l.b16 %v369
    %v621 = vunpack.c.l.b16 %v370
    %v622 = vunpack.c.h.b16 %v370
    %v623 = vunpack.c.l.b16 %v371
    %v624 = vunpack.c.h.b16 %v371
    %v625 = vunpack.c.l.b16 %v372
    %v626 = vunpack.c.l.b16 %v373
    %v627 = vunpack.c.h.b16 %v373
    %v628 = vunpack.c.l.b16 %v374
    %v629 = vunpack.c.h.b16 %v374
    %v630 = vunpack.c.l.b16 %v375
    %v631 = vunpack.c.l.b16 %v376
    %v632 = vunpack.c.h.b16 %v376
    %v633 = vunpack.c.l.b16 %v377
    %v634 = vunpack.c.h.b16 %v377
    %v635 = vunpack.c.l.b16 %v378
    %v636 = vunpack.c.l.b16 %v379
    %v637 = vunpack.c.h.b16 %v379
    %v638 = vunpack.c.l.b16 %v380
    %v639 = vunpack.c.h.b16 %v380
    %v640 = vunpack.c.l.b16 %v381
    %v641 = vunpack.c.l.b16 %v382
    %v642 = vunpack.c.h.b16 %v382
    %v643 = vunpack.c.l.b16 %v383
    %v644 = vunpack.c.h.b16 %v383
    %v645 = vunpack.c.l.b16 %v384
    %v646 = vunpack.c.l.b16 %v385
    %v647 = vunpack.c.h.b16 %v385
    %v648 = vunpack.c.l.b16 %v386
    %v649 = vunpack.c.h.b16 %v386
    %v650 = vunpack.c.l.b16 %v387
    %v651 = vunpack.c.l.b16 %v388
    %v652 = vunpack.c.h.b16 %v388
    %v653 = vunpack.c.l.b16 %v389
    %v654 = vunpack.c.h.b16 %v389
    %v655 = vunpack.c.l.b16 %v390
    %v656 = vunpack.c.l.b16 %v391
    %v657 = vunpack.c.h.b16 %v391
    %v658 = vunpack.c.l.b16 %v392
    %v659 = vunpack.c.h.b16 %v392
    %v660 = vunpack.c.l.b16 %v393
    %v661 = vunpack.c.l.b16 %v394
    %v662 = vunpack.c.h.b16 %v394
    %v663 = vunpack.c.l.b16 %v395
    %v664 = vunpack.c.h.b16 %v395
    %v665 = vunpack.c.l.b16 %v396
    %v666 = vunpack.c.l.b16 %v397
    %v667 = vunpack.c.h.b16 %v397
    %v668 = vunpack.c.l.b16 %v398
    %v669 = vunpack.c.h.b16 %v398
    %v670 = vunpack.c.l.b16 %v399
    %v671 = vunpack.c.l.b16 %v400
    %v672 = vunpack.c.h.b16 %v400
    %v673 = vunpack.c.l.b16 %v401
    %v674 = vunpack.c.h.b16 %v401
    %v675 = vunpack.c.l.b16 %v402
    %v676 = vunpack.c.l.b16 %v403
    %v677 = vunpack.c.h.b16 %v403
    %v678 = vunpack.c.l.b16 %v404
    %v679 = vunpack.c.h.b16 %v404
    %v680 = vunpack.c.l.b16 %v405
    %v681 = vunpack.c.l.b16 %v406
    %v682 = vunpack.c.h.b16 %v406
    %v683 = vunpack.c.l.b16 %v407
    %v684 = vunpack.c.h.b16 %v407
    %v685 = vunpack.c.l.b16 %v408
    %v686 = vunpack.c.l.b16 %v409
    %v687 = vunpack.c.h.b16 %v409
    %v688 = vunpack.c.l.b16 %v410
    %v689 = vunpack.c.h.b16 %v410
    %v690 = vunpack.c.l.b16 %v411
    %v691 = vunpack.c.l.b16 %v412
    %v692 = vunpack.c.h.b16 %v412
    %v693 = vunpack.c.l.b16 %v413
    %v694 = vunpack.c.h.b16 %v413
    %v695 = vunpack.c.l.b16 %v414
    %v696 = vunpack.c.l.b16 %v415
    %v697 = vunpack.c.h.b16 %v415
    %v698 = vunpack.c.l.b16 %v416
    %v699 = vunpack.c.h.b16 %v416
    %v700 = vunpack.c.l.b16 %v417
    %v701 = vpack.c.b16 %v546, %v541
    %v702 = vpack.c.b16 %v547, %v542
    %v703 = vpack.c.b16 %v548, %v543
    %v704 = vpack.c.b16 %v549, %v544
    %v705 = vpack.c.b16 %v550, %v545
    %v706 = vpack.c.b16 %v556, %v551
    %v707 = vpack.c.b16 %v557, %v552
    %v708 = vpack.c.b16 %v558, %v553
    %v709 = vpack.c.b16 %v559, %v554
    %v710 = vpack.c.b16 %v560, %v555
    %v711 = vpack.c.b16 %v566, %v561
    %v712 = vpack.c.b16 %v567, %v562
    %v713 = vpack.c.b16 %v568, %v563
    %v714 = vpack.c.b16 %v569, %v564
    %v715 = vpack.c.b16 %v570, %v565
    %v716 = vpack.c.b16 %v576, %v571
    %v717 = vpack.c.b16 %v577, %v572
    %v718 = vpack.c.b16 %v578, %v573
    %v719 = vpack.c.b16 %v579, %v574
    %v720 = vpack.c.b16 %v580, %v575
    %v721 = vpack.c.b16 %v586, %v581
    %v722 = vpack.c.b16 %v587, %v582
    %v723 = vpack.c.b16 %v588, %v583
    %v724 = vpack.c.b16 %v589, %v584
    %v725 = vpack.c.b16 %v590, %v585
    %v726 = vpack.c.b16 %v596, %v591
    %v727 = vpack.c.b16 %v597, %v592
    %v728 = vpack.c.b16 %v598, %v593
    %v729 = vpack.c.b16 %v599, %v594
    %v730 = vpack.c.b16 %v600, %v595
    %v731 = vpack.c.b16 %v606, %v601
    %v732 = vpack.c.b16 %v607, %v602
    %v733 = vpack.c.b16 %v608, %v603
    %v734 = vpack.c.b16 %v609, %v604
    %v735 = vpack.c.b16 %v610, %v605
    %v736 = vpack.c.b16 %v616, %v611
    %v737 = vpack.c.b16 %v617, %v612
    %v738 = vpack.c.b16 %v618, %v613
    %v739 = vpack.c.b16 %v619, %v614
    %v740 = vpack.c.b16 %v620, %v615
    %v741 = vpack.c.b16 %v626, %v621
    %v742 = vpack.c.b16 %v627, %v622
    %v743 = vpack.c.b16 %v628, %v623
    %v744 = vpack.c.b16 %v629, %v624
    %v745 = vpack.c.b16 %v630, %v625
    %v746 = vpack.c.b16 %v636, %v631
    %v747 = vpack.c.b16 %v637, %v632
    %v748 = vpack.c.b16 %v638, %v633
    %v749 = vpack.c.b16 %v639, %v634
    %v750 = vpack.c.b16 %v640, %v635
    %v751 = vpack.c.b16 %v646, %v641
    %v752 = vpack.c.b16 %v647, %v642
    %v753 = vpack.c.b16 %v648, %v643
    %v754 = vpack.c.b16 %v649, %v644
    %v755 = vpack.c.b16 %v650, %v645
    %v756 = vpack.c.b16 %v656, %v651
    %v757 = vpack.c.b16 %v657, %v652
    %v758 = vpack.c.b16 %v658, %v653
    %v759 = vpack.c.b16 %v659, %v654
    %v760 = vpack.c.b16 %v660, %v655
    %v761 = vpack.c.b16 %v666, %v661
    %v762 = vpack.c.b16 %v667, %v662
    %v763 = vpack.c.b16 %v668, %v663
    %v764 = vpack.c.b16 %v669, %v664
    %v765 = vpack.c.b16 %v670, %v665
    %v766 = vpack.c.b16 %v676, %v671
    %v767 = vpack.c.b16 %v677, %v672
    %v768 = vpack.c.b16 %v678, %v673
    %v769 = vpack.c.b16 %v679, %v674
    %v770 = vpack.c.b16 %v680, %v675
    %v771 = vpack.c.b16 %v686, %v681
    %v772 = vpack.c.b16 %v687, %v682
    %v773 = vpack.c.b16 %v688, %v683
    %v774 = vpack.c.b16 %v689, %v684
    %v775 = vpack.c.b16 %v690, %v685
    %v776 = vpack.c.b16 %v696, %v691
    %v777 = vpack.c.b16 %v697, %v692
    %v778 = vpack.c.b16 %v698, %v693
    %v779 = vpack.c.b16 %v699, %v694
    %v780 = vpack.c.b16 %v700, %v695
    %861 = vmatprep.subr.bf16.mxu0 %v702
    %862 = vmatpush1.bf16.msra.mxu0 %v701
    %863 = vmatprep.subr.bf16.mxu0 %v707
    %864 = vmatpush1.bf16.msra.mxu0 %v706
    %865 = vmatprep.subr.bf16.mxu0 %v712
    %866 = vmatpush1.bf16.msra.mxu0 %v711
    %867 = vmatprep.subr.bf16.mxu0 %v717
    %868 = vmatpush1.bf16.msra.mxu0 %v716
    %869 = vmatprep.subr.bf16.mxu0 %v722
    %870 = vmatpush1.bf16.msra.mxu0 %v721
    %871 = vmatprep.subr.bf16.mxu0 %v727
    %872 = vmatpush1.bf16.msra.mxu0 %v726
    %873 = vmatprep.subr.bf16.mxu0 %v732
    %874 = vmatpush1.bf16.msra.mxu0 %v731
    %875 = vmatprep.subr.bf16.mxu0 %v737
    %876 = vmatpush1.bf16.msra.mxu0 %v736
    %877 = vmatprep.subr.bf16.mxu0 %v742
    %878 = vmatpush1.bf16.msra.mxu0 %v741
    %879 = vmatprep.subr.bf16.mxu0 %v747
    %880 = vmatpush1.bf16.msra.mxu0 %v746
    %881 = vmatprep.subr.bf16.mxu0 %v752
    %882 = vmatpush1.bf16.msra.mxu0 %v751
    %883 = vmatprep.subr.bf16.mxu0 %v757
    %884 = vmatpush1.bf16.msra.mxu0 %v756
    %885 = vmatprep.subr.bf16.mxu0 %v762
    %886 = vmatpush1.bf16.msra.mxu0 %v761
    %887 = vmatprep.subr.bf16.mxu0 %v767
    %888 = vmatpush1.bf16.msra.mxu0 %v766
    %889 = vmatprep.subr.bf16.mxu0 %v772
    %890 = vmatpush1.bf16.msra.mxu0 %v771
    %891 = vmatprep.subr.bf16.mxu0 %v777
    %892 = vmatpush1.bf16.msra.mxu0 %v776
    %893 = vmatprep.mubr.bf16.mxu0 %v321
    %894 = vmatmul.mubr.bf16.gmra.mrb[0].mxu0 %v320
    %v895 = vpop.f32.mrb[0].mxu0
    %v896 = vadd.f32 %v423, %v895
    %v897 = vpop.f32.mrb[0].mxu0
    %v898 = vadd.f32 %v427, %v897
    %v899 = vpop.f32.mrb[0].mxu0
    %v900 = vpop.f32.mrb[0].mxu0
    %901 = vdwg.mxu0
    %902 = vmatprep.subr.bf16.mxu0 %v704
    %903 = vmatpush1.bf16.msra.mxu0 %v703
    %904 = vmatprep.subr.bf16.mxu0 %v709
    %905 = vmatpush1.bf16.msra.mxu0 %v708
    %906 = vmatprep.subr.bf16.mxu0 %v714
    %907 = vmatpush1.bf16.msra.mxu0 %v713
    %908 = vmatprep.subr.bf16.mxu0 %v719
    %909 = vmatpush1.bf16.msra.mxu0 %v718
    %910 = vmatprep.subr.bf16.mxu0 %v724
    %911 = vmatpush1.bf16.msra.mxu0 %v723
    %912 = vmatprep.subr.bf16.mxu0 %v729
    %913 = vmatpush1.bf16.msra.mxu0 %v728
    %914 = vmatprep.subr.bf16.mxu0 %v734
    %915 = vmatpush1.bf16.msra.mxu0 %v733
    %916 = vmatprep.subr.bf16.mxu0 %v739
    %917 = vmatpush1.bf16.msra.mxu0 %v738
    %918 = vmatprep.subr.bf16.mxu0 %v744
    %919 = vmatpush1.bf16.msra.mxu0 %v743
    %920 = vmatprep.subr.bf16.mxu0 %v749
    %921 = vmatpush1.bf16.msra.mxu0 %v748
    %922 = vmatprep.subr.bf16.mxu0 %v754
    %923 = vmatpush1.bf16.msra.mxu0 %v753
    %924 = vmatprep.subr.bf16.mxu0 %v759
    %925 = vmatpush1.bf16.msra.mxu0 %v758
    %926 = vmatprep.subr.bf16.mxu0 %v764
    %927 = vmatpush1.bf16.msra.mxu0 %v763
    %928 = vmatprep.subr.bf16.mxu0 %v769
    %929 = vmatpush1.bf16.msra.mxu0 %v768
    %930 = vmatprep.subr.bf16.mxu0 %v774
    %931 = vmatpush1.bf16.msra.mxu0 %v773
    %932 = vmatprep.subr.bf16.mxu0 %v779
    %933 = vmatpush1.bf16.msra.mxu0 %v778
    %934 = vmatprep.mubr.bf16.mxu0 %v321
    %935 = vmatmul.mubr.bf16.gmra.mrb[0].mxu0 %v320
    %v936 = vpop.f32.mrb[0].mxu0
    %v937 = vadd.f32 %v431, %v936
    %v938 = vpop.f32.mrb[0].mxu0
    %v939 = vadd.f32 %v435, %v938
    %v940 = vpop.f32.mrb[0].mxu0
    %v941 = vpop.f32.mrb[0].mxu0
    %942 = vdwg.mxu0
    %943 = vmatprep.subr.bf16.mxu0 0
    %944 = vmatpush1.bf16.msra.mxu0 %v705
    %945 = vmatprep.subr.bf16.mxu0 0
    %946 = vmatpush1.bf16.msra.mxu0 %v710
    %947 = vmatprep.subr.bf16.mxu0 0
    %948 = vmatpush1.bf16.msra.mxu0 %v715
    %949 = vmatprep.subr.bf16.mxu0 0
    %950 = vmatpush1.bf16.msra.mxu0 %v720
    %951 = vmatprep.subr.bf16.mxu0 0
    %952 = vmatpush1.bf16.msra.mxu0 %v725
    %953 = vmatprep.subr.bf16.mxu0 0
    %954 = vmatpush1.bf16.msra.mxu0 %v730
    %955 = vmatprep.subr.bf16.mxu0 0
    %956 = vmatpush1.bf16.msra.mxu0 %v735
    %957 = vmatprep.subr.bf16.mxu0 0
    %958 = vmatpush1.bf16.msra.mxu0 %v740
    %959 = vmatprep.subr.bf16.mxu0 0
    %960 = vmatpush1.bf16.msra.mxu0 %v745
    %961 = vmatprep.subr.bf16.mxu0 0
    %962 = vmatpush1.bf16.msra.mxu0 %v750
    %963 = vmatprep.subr.bf16.mxu0 0
    %964 = vmatpush1.bf16.msra.mxu0 %v755
    %965 = vmatprep.subr.bf16.mxu0 0
    %966 = vmatpush1.bf16.msra.mxu0 %v760
    %967 = vmatprep.subr.bf16.mxu0 0
    %968 = vmatpush1.bf16.msra.mxu0 %v765
    %969 = vmatprep.subr.bf16.mxu0 0
    %970 = vmatpush1.bf16.msra.mxu0 %v770
    %971 = vmatprep.subr.bf16.mxu0 0
    %972 = vmatpush1.bf16.msra.mxu0 %v775
    %973 = vmatprep.subr.bf16.mxu0 0
    %974 = vmatpush1.bf16.msra.mxu0 %v780
    %975 = vmatprep.mubr.bf16.mxu0 %v321
    %976 = vmatmul.mubr.bf16.gmra.mrb[0].mxu0 %v320
    %v977 = vpop.f32.mrb[0].mxu0
    %v978 = vadd.f32 %v439, %v977
    %v979 = vpop.f32.mrb[0].mxu0
    %v980 = vpop.f32.mrb[0].mxu0
    %v981 = vpop.f32.mrb[0].mxu0
    %982 = vdwg.mxu0
    %983 = vst [vmem:[#allocation8] sm:$0xff] %v896
    %984 = vst [vmem:[#allocation8 + $0x8] sm:$0xff] %v898
    %985 = vst [vmem:[#allocation8 + $0x10] sm:$0xff] %v937
    %986 = vst [vmem:[#allocation8 + $0x18] sm:$0xff] %v939
    %987 = vst [vmem:[#allocation8 + $0x20] sm:$0xff] %v978
    // Predicated region
    $region34: #{tpu_custom_call.1} parent=1 // pred_check
      _
    $region35: #{tpu_custom_call.1} parent=1 // pred_check_branch
      %989 = sbr.rel (0) target = $region37
    $region36: #{tpu_custom_call.1} parent=1 // pred_region
      %s991 = ssub.s32 640, 640
      %992 = vsyncadd [#allocation4], %s991
      %s994 = sshll.u32 [#allocation8], 4
      %s995 = int_to_ptr.vmem [resolvable:$true] %s994
      %997 = dma.vmem_to_hbm [thread:$0]  %s995, 640, %s5, [#allocation4]
    $region37: #{tpu_custom_call.1} parent=1 // pred_fallthru
      _
    // Predicated region
    $region38: #{tpu_custom_call.1} parent=1 // pred_check
      _
    $region39: #{tpu_custom_call.1} parent=1 // pred_check_branch
      %999 = sbr.rel (0) target = $region41
    $region40: #{tpu_custom_call.1} parent=1 // pred_region
      %1000 = dma.done [#allocation4], 640
    $region41: #{tpu_custom_call.1} parent=1 // pred_fallthru
      _
    %1001 = vsyncpa [#allocation3], 1
    %1002 = vsyncpa [#allocation6], 1
    %1003 = vsyncpa [#allocation4], 1

</llo_original>
